<compile_context>
chip_gen: v6e
topology: v6e:2x2x1
jax: 0.10.0
libtpu: 0.0.40
codegen_flags: <defaults>
</compile_context>

<pallas_src>
import functools

import jax
import jax.numpy as jnp
from jax.experimental import pallas as pl
from jax.experimental.pallas import tpu as pltpu

EPS = 1e-5  # ConditionalLayerNorm eps

# Row layout of the packed (8, D) constants block.
_ROW_PROJ_B = 0
_ROW_LNW_W = 1
_ROW_LNW_B = 2
_ROW_LNB_W = 3
_ROW_LNB_B = 4
_ROW_MASK_TOK = 5


def _round_up(x, m):
    return (x + m - 1) // m * m


def _choose_tiling(seq_len, batch, max_rows):
    """Pick (tile_rows, padded_seq_len)."""
    divs = [c for c in range(8, min(seq_len, max_rows) + 1, 8) if seq_len % c == 0]
    if divs:
        # Prefer tiles that leave >= 2 total grid steps so megacore / both v7x
        # TensorCores get work even for B == 1.
        ok = [c for c in divs if (seq_len // c) * batch >= 2]
        ts = max(ok) if ok else max(divs)
        return ts, seq_len
    # No multiple-of-8 divisor: pad the sequence dim up to a tile multiple; the
    # wrapper slices the garbage tail rows off afterwards.
    ts = min(max_rows, _round_up(seq_len, 8))
    return ts, _round_up(seq_len, ts)


def scot_embed_kernel(time_ref,                 # SMEM [B] (scalar prefetch)
                      patches_ref,              # [TS, K]   matmul dtype
                      w_ref,                    # [K, D]    matmul dtype
                      consts_ref,               # [8, D]    f32 packed constants
                      mask_ref,                 # [TS, 1]   f32
                      pos_ref,                  # [TS, D]   pos dtype
                      out_ref,                  # [TS, D]   f32
                      *, hidden_dim):
    b_idx = pl.program_id(1)                    # batch is the inner grid axis
    tval = time_ref[b_idx]                      # scalar time from SMEM

    # --- patch projection: the stride=patch Conv2d as one MXU matmul (f32 acc)
    proj = jnp.dot(patches_ref[...], w_ref[...],
                   preferred_element_type=jnp.float32)
    proj = proj + consts_ref[_ROW_PROJ_B:_ROW_PROJ_B + 1, :]

    # --- ConditionalLayerNorm (module formula: var = E[x^2] - mean^2), f32 ---
    inv_d = 1.0 / hidden_dim
    mean = jnp.sum(proj, axis=-1, keepdims=True) * inv_d
    ex2 = jnp.sum(proj * proj, axis=-1, keepdims=True) * inv_d
    var = jnp.maximum(ex2 - mean * mean, 0.0)   # clamp guards fp cancellation
    rstd = jax.lax.rsqrt(var + EPS)             # EUP, not a VPU divide
    xn = (proj - mean) * rstd

    # Conditional affine from scalar time: Linear(1, D) evaluated in-kernel.
    cw = tval * consts_ref[_ROW_LNW_W:_ROW_LNW_W + 1, :] \
        + consts_ref[_ROW_LNW_B:_ROW_LNW_B + 1, :]
    cb = tval * consts_ref[_ROW_LNB_W:_ROW_LNB_W + 1, :] \
        + consts_ref[_ROW_LNB_B:_ROW_LNB_B + 1, :]
    y = cw * xn + cb

    # --- mask-token blend (masked rows get the mask token) ---
    m = mask_ref[...]                           # [TS, 1] in {0, 1}
    y = jnp.where(m > 0.5, consts_ref[_ROW_MASK_TOK:_ROW_MASK_TOK + 1, :], y)

    # --- absolute position embeddings ---
    y = y + pos_ref[...].astype(jnp.float32)

    # TODO(synk): nn.Dropout(hidden_dropout_prob) is identity in eval mode; not applied.
    out_ref[...] = y.astype(out_ref.dtype)


def scot_embeddings(pixel_values, params, bool_masked_pos, time, patch_size,
                    *, matmul_dtype=jnp.bfloat16, pos_dtype=jnp.bfloat16,
                    max_tile_rows=1024):
    B, C, H, W = pixel_values.shape
    ph, pw = patch_size
    Hp, Wp = H // ph, W // pw        # assume divisible (module's maybe_pad is a no-op)
    S = Hp * Wp
    D = params["proj_w"].shape[0]
    K = C * ph * pw

    TS, Sp = _choose_tiling(S, B, max_tile_rows)
    s_tiles = Sp // TS

    # Unfold the stride=patch conv into patch vectors, feature order (c, kh, kw)
    # matching nn.Conv2d weight.reshape(D, C*ph*pw).  Cast to the matmul dtype
    # *first* so the materialized transposed copy is half-size when bf16.
    patches = pixel_values.astype(matmul_dtype).reshape(B, C, Hp, ph, Wp, pw)
    patches = patches.transpose(0, 2, 4, 1, 3, 5).reshape(B, S, K)

    pos = params["pos_emb"].reshape(S, D)
    if bool_masked_pos is None:
        mask = jnp.zeros((B, S), jnp.float32)
    else:
        mask = bool_masked_pos.astype(jnp.float32).reshape(B, S)

    if Sp != S:   # pad sequence dim up to a tile multiple (tail rows dropped)
        patches = jnp.pad(patches, ((0, 0), (0, Sp - S), (0, 0)))
        pos = jnp.pad(pos, ((0, Sp - S), (0, 0)))
        mask = jnp.pad(mask, ((0, 0), (0, Sp - S)))

    w = jnp.transpose(params["proj_w"].reshape(D, K)).astype(matmul_dtype)   # [K, D]
    pos = pos.astype(pos_dtype)                                              # [Sp, D]
    mask = mask.reshape(B, Sp, 1)                                            # [B, Sp, 1]
    time = time.astype(jnp.float32).reshape(B)

    # Pack the six (1, D) broadcast constants into one (8, D) tile.
    consts = jnp.concatenate(
        [params["proj_b"].reshape(1, D),
         params["ln_w_weight"].reshape(1, D),
         params["ln_w_bias"].reshape(1, D),
         params["ln_b_weight"].reshape(1, D),
         params["ln_b_bias"].reshape(1, D),
         params["mask_token"].reshape(1, D),
         jnp.zeros((2, D), jnp.float32)], axis=0).astype(jnp.float32)

    kernel = functools.partial(scot_embed_kernel, hidden_dim=D)

    out = pl.pallas_call(
        kernel,
        out_shape=jax.ShapeDtypeStruct((B, Sp, D), jnp.float32),
        grid_spec=pltpu.PrefetchScalarGridSpec(
            num_scalar_prefetch=1,                 # `time` -> SMEM
            grid=(s_tiles, B),                     # batch innermost: pos tile stays resident
            in_specs=[
                pl.BlockSpec((None, TS, K), lambda s, b, tm: (b, s, 0)),   # patches
                pl.BlockSpec((K, D), lambda s, b, tm: (0, 0)),             # proj weight
                pl.BlockSpec((8, D), lambda s, b, tm: (0, 0)),             # packed constants
                pl.BlockSpec((None, TS, 1), lambda s, b, tm: (b, s, 0)),   # bool mask (f32)
                pl.BlockSpec((TS, D), lambda s, b, tm: (s, 0)),            # pos emb (s only)
            ],
            out_specs=pl.BlockSpec((None, TS, D), lambda s, b, tm: (b, s, 0)),
        ),
        compiler_params=pltpu.CompilerParams(
            dimension_semantics=("parallel", "arbitrary"),
            vmem_limit_bytes=32 * 1024 * 1024,
        ),
    )(time, patches, w, consts, mask, pos)

    if Sp != S:
        out = out[:, :S, :]
    return out, (Hp, Wp)


def reference_jax(pixel_values, params, bool_masked_pos, time, patch_size):
    """Pure-JAX reference mirroring the PyTorch forward, for verification."""
    B, C, H, W = pixel_values.shape
    ph, pw = patch_size
    Hp, Wp = H // ph, W // pw
    S = Hp * Wp
    D = params["proj_w"].shape[0]
    K = C * ph * pw
    patches = pixel_values.reshape(B, C, Hp, ph, Wp, pw)
    patches = patches.transpose(0, 2, 4, 1, 3, 5).reshape(B, S, K)
    emb = patches @ jnp.transpose(params["proj_w"].reshape(D, K)) + params["proj_b"]
    mean = emb.mean(-1, keepdims=True)
    var = (emb ** 2).mean(-1, keepdims=True) - mean ** 2
    xn = (emb - mean) / jnp.sqrt(var + EPS)
    cw = (time[:, None] * params["ln_w_weight"][None, :] + params["ln_w_bias"][None, :])[:, None, :]
    cb = (time[:, None] * params["ln_b_weight"][None, :] + params["ln_b_bias"][None, :])[:, None, :]
    emb = cw * xn + cb
    if bool_masked_pos is not None:
        m = bool_masked_pos.astype(jnp.float32)[..., None]
        emb = emb * (1.0 - m) + params["mask_token"].reshape(1, 1, D) * m
    emb = emb + params["pos_emb"].reshape(1, S, D)
    return emb, (Hp, Wp)


if __name__ == "__main__":
    # Small config: image 16x16, patch 4, C=4 channels, embed_dim D=32, batch 2.
    B, C, H, W = 2, 4, 16, 16
    ph = pw = 4
    D = 32
    Hp, Wp = H // ph, W // pw
    S = Hp * Wp
    K = C * ph * pw

    key = jax.random.PRNGKey(0)
    ks = jax.random.split(key, 10)
    pixel_values = jax.random.normal(ks[0], (B, C, H, W), jnp.float32)
    time = jax.random.uniform(ks[1], (B,), jnp.float32)
    bool_masked_pos = jax.random.bernoulli(ks[2], 0.3, (B, S))

    params = {
        # nn.Conv2d(C, D, kernel=patch, stride=patch): weight [D, C, ph, pw], bias [D]
        "proj_w": 0.02 * jax.random.normal(ks[3], (D, C, ph, pw), jnp.float32),
        "proj_b": 0.01 * jax.random.normal(ks[4], (D,), jnp.float32),
        # ConditionalLayerNorm: weight = nn.Linear(1, D), bias = nn.Linear(1, D)
        "ln_w_weight": 0.1 * jax.random.normal(ks[5], (D,), jnp.float32),
        "ln_w_bias": jnp.ones((D,), jnp.float32),
        "ln_b_weight": 0.1 * jax.random.normal(ks[6], (D,), jnp.float32),
        "ln_b_bias": jnp.zeros((D,), jnp.float32),
        # mask_token / position_embeddings are zero-init nn.Parameters; use small
        # deterministic values so the blend/add paths are exercised.
        "mask_token": 0.05 * jax.random.normal(ks[7], (1, 1, D), jnp.float32),
        "pos_emb": 0.02 * jax.random.normal(ks[8], (1, S, D), jnp.float32),
    }

    ref, ref_dims = reference_jax(pixel_values, params, bool_masked_pos, time, (ph, pw))

    # Default path: bf16 matmul operands + bf16 pos (HBM-traffic optimized),
    # f32 LN math and f32 output.
    out, out_dims = scot_embeddings(pixel_values, params, bool_masked_pos, time, (ph, pw))
    out = jax.block_until_ready(out)
    assert out.shape == (B, S, D)
    assert out_dims == ref_dims == (Hp, Wp)
    assert jnp.allclose(out, ref, atol=5e-2, rtol=5e-2), \
        float(jnp.max(jnp.abs(out - ref)))

    # Strict f32 path for tight numerical verification.
    out_f32, _ = scot_embeddings(pixel_values, params, bool_masked_pos, time, (ph, pw),
                                 matmul_dtype=jnp.float32, pos_dtype=jnp.float32)
    out_f32 = jax.block_until_ready(out_f32)
    assert jnp.allclose(out_f32, ref, atol=1e-4, rtol=1e-4), \
        float(jnp.max(jnp.abs(out_f32 - ref)))

    print("KERNEL_OK")
</pallas_src>

<mosaic_0001>
module attributes {stable_mosaic.version = 11 : i64} {
  func.func @scot_embed_kernel(%arg0: i32, %arg1: i32, %arg2: memref<2xf32, #tpu.memory_space<smem>>, %arg3: memref<1x16x64xbf16, #tpu.memory_space<vmem>>, %arg4: memref<64x32xbf16, #tpu.memory_space<vmem>>, %arg5: memref<8x32xf32, #tpu.memory_space<vmem>>, %arg6: memref<1x16x1xf32, #tpu.memory_space<vmem>>, %arg7: memref<16x32xbf16, #tpu.memory_space<vmem>>, %arg8: memref<1x16x32xf32, #tpu.memory_space<vmem>>) attributes {dimension_semantics = [#tpu.dimension_semantics<parallel>, #tpu.dimension_semantics<arbitrary>], iteration_bounds = array<i64: 1, 2>, scalar_prefetch = 1 : i64, scratch_operands = 0 : i64, tpu.core_type = #tpu.core_type<tc>, window_params = [{transform_indices = @transform_0, window_bounds = array<i64: 1, 16, 64>}, {pipeline_mode = #tpu.pipeline_mode<synchronous>, transform_indices = @transform_1, window_bounds = array<i64: 64, 32>}, {pipeline_mode = #tpu.pipeline_mode<synchronous>, transform_indices = @transform_2, window_bounds = array<i64: 8, 32>}, {transform_indices = @transform_3, window_bounds = array<i64: 1, 16, 1>}, {transform_indices = @transform_4, window_bounds = array<i64: 16, 32>}, {transform_indices = @transform_5, window_bounds = array<i64: 1, 16, 32>}]} {
    %0 = arith.index_cast %arg1 : i32 to index
    %1 = memref.load %arg2[%0] : memref<2xf32, #tpu.memory_space<smem>>
    %c0 = arith.constant 0 : index
    %c0_0 = arith.constant 0 : index
    %c0_1 = arith.constant 0 : index
    %2 = vector.load %arg3[%c0, %c0_0, %c0_1] : memref<1x16x64xbf16, #tpu.memory_space<vmem>>, vector<1x16x64xbf16>
    %3 = vector.shape_cast %2 : vector<1x16x64xbf16> to vector<16x64xbf16>
    %c0_2 = arith.constant 0 : index
    %c0_3 = arith.constant 0 : index
    %4 = vector.load %arg4[%c0_2, %c0_3] : memref<64x32xbf16, #tpu.memory_space<vmem>>, vector<64x32xbf16>
    %cst = arith.constant dense<0.000000e+00> : vector<16x32xf32>
    %5 = tpu.matmul %3, %4, %cst {dimension_numbers = #tpu.dot_dimension_numbers<[1], [0], [0], [1], [0, 0, 1, 1], [], []>} : vector<16x64xbf16>, vector<64x32xbf16>, vector<16x32xf32> -> vector<16x32xf32>
    %c0_4 = arith.constant 0 : index
    %c0_5 = arith.constant 0 : index
    %6 = vector.load %arg5[%c0_4, %c0_5] : memref<8x32xf32, #tpu.memory_space<vmem>>, vector<1x32xf32>
    %7 = vector.broadcast %6 : vector<1x32xf32> to vector<16x32xf32>
    %8 = arith.addf %5, %7 : vector<16x32xf32>
    %cst_6 = arith.constant dense<0.000000e+00> : vector<16xf32>
    %9 = vector.multi_reduction <add>, %8, %cst_6 [1] : vector<16x32xf32> to vector<16xf32>
    %10 = vector.shape_cast %9 : vector<16xf32> to vector<16x1xf32>
    %cst_7 = arith.constant 3.125000e-02 : f32
    %11 = vector.broadcast %cst_7 : f32 to vector<16x1xf32>
    %12 = arith.mulf %10, %11 : vector<16x1xf32>
    %13 = arith.mulf %8, %8 : vector<16x32xf32>
    %cst_8 = arith.constant dense<0.000000e+00> : vector<16xf32>
    %14 = vector.multi_reduction <add>, %13, %cst_8 [1] : vector<16x32xf32> to vector<16xf32>
    %15 = vector.shape_cast %14 : vector<16xf32> to vector<16x1xf32>
    %cst_9 = arith.constant 3.125000e-02 : f32
    %16 = vector.broadcast %cst_9 : f32 to vector<16x1xf32>
    %17 = arith.mulf %15, %16 : vector<16x1xf32>
    %18 = arith.mulf %12, %12 : vector<16x1xf32>
    %19 = arith.subf %17, %18 : vector<16x1xf32>
    %cst_10 = arith.constant 0.000000e+00 : f32
    %20 = vector.broadcast %cst_10 : f32 to vector<16x1xf32>
    %21 = arith.maximumf %19, %20 : vector<16x1xf32>
    %cst_11 = arith.constant 9.99999974E-6 : f32
    %22 = vector.broadcast %cst_11 : f32 to vector<16x1xf32>
    %23 = arith.addf %21, %22 : vector<16x1xf32>
    %24 = math.rsqrt %23 : vector<16x1xf32>
    %25 = vector.broadcast %12 : vector<16x1xf32> to vector<16x32xf32>
    %26 = arith.subf %8, %25 : vector<16x32xf32>
    %27 = vector.broadcast %24 : vector<16x1xf32> to vector<16x32xf32>
    %28 = arith.mulf %26, %27 : vector<16x32xf32>
    %c1 = arith.constant 1 : index
    %c0_12 = arith.constant 0 : index
    %29 = vector.load %arg5[%c1, %c0_12] : memref<8x32xf32, #tpu.memory_space<vmem>>, vector<1x32xf32>
    %30 = vector.broadcast %1 : f32 to vector<1x32xf32>
    %31 = arith.mulf %30, %29 : vector<1x32xf32>
    %c2 = arith.constant 2 : index
    %c0_13 = arith.constant 0 : index
    %32 = vector.load %arg5[%c2, %c0_13] : memref<8x32xf32, #tpu.memory_space<vmem>>, vector<1x32xf32>
    %33 = arith.addf %31, %32 : vector<1x32xf32>
    %c3 = arith.constant 3 : index
    %c0_14 = arith.constant 0 : index
    %34 = vector.load %arg5[%c3, %c0_14] : memref<8x32xf32, #tpu.memory_space<vmem>>, vector<1x32xf32>
    %35 = vector.broadcast %1 : f32 to vector<1x32xf32>
    %36 = arith.mulf %35, %34 : vector<1x32xf32>
    %c4 = arith.constant 4 : index
    %c0_15 = arith.constant 0 : index
    %37 = vector.load %arg5[%c4, %c0_15] : memref<8x32xf32, #tpu.memory_space<vmem>>, vector<1x32xf32>
    %38 = arith.addf %36, %37 : vector<1x32xf32>
    %39 = vector.broadcast %33 : vector<1x32xf32> to vector<16x32xf32>
    %40 = arith.mulf %39, %28 : vector<16x32xf32>
    %41 = vector.broadcast %38 : vector<1x32xf32> to vector<16x32xf32>
    %42 = arith.addf %40, %41 : vector<16x32xf32>
    %c0_16 = arith.constant 0 : index
    %c0_17 = arith.constant 0 : index
    %c0_18 = arith.constant 0 : index
    %43 = vector.load %arg6[%c0_16, %c0_17, %c0_18] : memref<1x16x1xf32, #tpu.memory_space<vmem>>, vector<1x16x1xf32>
    %44 = vector.shape_cast %43 : vector<1x16x1xf32> to vector<16x1xf32>
    %cst_19 = arith.constant 5.000000e-01 : f32
    %45 = vector.broadcast %cst_19 : f32 to vector<16x1xf32>
    %46 = arith.cmpf ogt, %44, %45 : vector<16x1xf32>
    %c5 = arith.constant 5 : index
    %c0_20 = arith.constant 0 : index
    %47 = vector.load %arg5[%c5, %c0_20] : memref<8x32xf32, #tpu.memory_space<vmem>>, vector<1x32xf32>
    %48 = vector.shape_cast %46 : vector<16x1xi1> to vector<16x1xi1>
    %49 = vector.broadcast %48 : vector<16x1xi1> to vector<16x32xi1>
    %50 = vector.shape_cast %47 : vector<1x32xf32> to vector<1x32xf32>
    %51 = vector.broadcast %50 : vector<1x32xf32> to vector<16x32xf32>
    %52 = arith.select %49, %51, %42 : vector<16x32xi1>, vector<16x32xf32>
    %c0_21 = arith.constant 0 : index
    %c0_22 = arith.constant 0 : index
    %53 = vector.load %arg7[%c0_21, %c0_22] : memref<16x32xbf16, #tpu.memory_space<vmem>>, vector<16x32xbf16>
    %54 = arith.extf %53 : vector<16x32xbf16> to vector<16x32xf32>
    %55 = arith.addf %52, %54 : vector<16x32xf32>
    %c0_23 = arith.constant 0 : index
    %c0_24 = arith.constant 0 : index
    %c0_25 = arith.constant 0 : index
    %56 = vector.load %arg8[%c0_23, %c0_24, %c0_25] : memref<1x16x32xf32, #tpu.memory_space<vmem>>, vector<1x16x32xf32>
    %57 = vector.shape_cast %56 : vector<1x16x32xf32> to vector<16x32xf32>
    %58 = vector.shape_cast %55 : vector<16x32xf32> to vector<1x16x32xf32>
    tpu.vector_store %arg8[%c0_23, %c0_24, %c0_25], %58 {strides = array<i32>} : memref<1x16x32xf32, #tpu.memory_space<vmem>>, vector<1x16x32xf32>,
    return
  }
  func.func @transform_0(%arg0: i32, %arg1: i32, %arg2: memref<2xf32, #tpu.memory_space<smem>>) -> (i32, i32, i32) {
    %c0_i32 = arith.constant 0 : i32
    %c0_i32_0 = arith.constant 0 : i32
    return %arg1, %arg0, %c0_i32 : i32, i32, i32
  }
  func.func @transform_1(%arg0: i32, %arg1: i32, %arg2: memref<2xf32, #tpu.memory_space<smem>>) -> (i32, i32) {
    %c0_i32 = arith.constant 0 : i32
    %c0_i32_0 = arith.constant 0 : i32
    %c0_i32_1 = arith.constant 0 : i32
    return %c0_i32, %c0_i32_0 : i32, i32
  }
  func.func @transform_2(%arg0: i32, %arg1: i32, %arg2: memref<2xf32, #tpu.memory_space<smem>>) -> (i32, i32) {
    %c0_i32 = arith.constant 0 : i32
    %c0_i32_0 = arith.constant 0 : i32
    %c0_i32_1 = arith.constant 0 : i32
    return %c0_i32, %c0_i32_0 : i32, i32
  }
  func.func @transform_3(%arg0: i32, %arg1: i32, %arg2: memref<2xf32, #tpu.memory_space<smem>>) -> (i32, i32, i32) {
    %c0_i32 = arith.constant 0 : i32
    %c0_i32_0 = arith.constant 0 : i32
    return %arg1, %arg0, %c0_i32 : i32, i32, i32
  }
  func.func @transform_4(%arg0: i32, %arg1: i32, %arg2: memref<2xf32, #tpu.memory_space<smem>>) -> (i32, i32) {
    %c0_i32 = arith.constant 0 : i32
    %c0_i32_0 = arith.constant 0 : i32
    return %arg0, %c0_i32 : i32, i32
  }
  func.func @transform_5(%arg0: i32, %arg1: i32, %arg2: memref<2xf32, #tpu.memory_space<smem>>) -> (i32, i32, i32) {
    %c0_i32 = arith.constant 0 : i32
    %c0_i32_0 = arith.constant 0 : i32
    return %arg1, %arg0, %c0_i32 : i32, i32, i32
  }
}

</mosaic_0001>

<llo_original>
// kernel: tpu_custom_call.1
$region0: #{tpu_custom_call.1}
  #allocation0 [shape = 'u32[]', space=smem, size = 0x4, offset = 0x4, fixed_abs, tag = 'smem constant byte address 0x4 - core index']
  #allocation1 [shape = 'u32[144,128]{1,0:T(1,128)}', space=vmem, size = 0x12000, scoped, tag = 'internal scratch']
  #allocation2 [shape = 's32[1]{0}', space=sflag, size = 0x4, scoped, tag = 'scoped memory for tpu_custom_call.1']
  #allocation3 [shape = 'u8[512]{0}', space=smem, size = 0x200, scoped, tag = 'prefetched SMEM operand 0']
  %s0 = inlined_call_operand.vmem [shape: f32[2], index: 0, kind: input, shape index: {}]
  %s1 = inlined_call_operand.vmem [shape: bf16[2,16,64], index: 1, kind: input, shape index: {}]
  %s2 = inlined_call_operand.vmem [shape: bf16[64,32], index: 2, kind: input, shape index: {}]
  %s3 = inlined_call_operand.vmem [shape: f32[8,32], index: 3, kind: input, shape index: {}]
  %s4 = inlined_call_operand.vmem [shape: f32[2,16,1], index: 4, kind: input, shape index: {}]
  %s5 = inlined_call_operand.vmem [shape: bf16[16,32], index: 5, kind: input, shape index: {}]
  %s6 = inlined_call_operand.hbm [shape: f32[2,16,32], index: 6, kind: output, shape index: {}]
  %s7 = sld [smem:[#allocation0]]
  $region53: #{tpu_custom_call.1} parent=0
    _
  %s9 = ssub.s32 1, %s7
  %s10 = scalar_select 0, %s9, %s7
  %s11 = sshll.u32 %s0, 4
  %s12 = int_to_ptr.vmem [resolvable:$true] %s11
  %14 = dma.vmem_to_smem %s12, 16, [#allocation3], [#allocation2]
  %15 = dma.done [#allocation2], 16
  %16 = sfence
  $region1: #{tpu_custom_call.1} parent=0
    #allocation4 [shape = 'u8[16384]{0}', space=vmem, size = 0x4000, scoped, tag = 'output window, operand 0']
    #allocation5 [shape = 's32[2]{0}', space=sflag, size = 0x8, scoped, tag = 'scoped memory for tpu_custom_call.1']
    %17 = vsyncpa [#allocation5], 0
    %s18 = scalar_lea.sflag [#allocation5], 1
    %19 = vsyncpa %s18, 0
    loop: start=0, step=1, limit=4
    $region2: #{tpu_custom_call.1} parent=1 // loop_pre_header
      _
    $region3: #{tpu_custom_call.1} parent=1 // loop_header
      %s21 = sphi 0, %s25
      %p22 = scmp.ge.s32.totalorder %s21, 4
      %s28 = sphi 0, %s40
      %s29 = sphi 0, %s36
      %s30 = sphi 0, %s28
      %s31 = sphi 0, %s29
      %s32 = sphi 0, %s30
      %s33 = sphi 0, %s31
      %s45 = sphi 0, %s47
      %s48 = sphi 0, %s45
      %s49 = sphi 0, %s48
      %s65 = sphi 0, %s49
      %s69 = sphi 0, %s69
      %s71 = sphi 0, %s69
      %s72 = sphi 0, %s71
      %s86 = sphi 0, %s72
      %s90 = sphi 0, %s90
      %s92 = sphi 0, %s90
      %s93 = sphi 0, %s92
      %s107 = sphi 0, %s93
      %s115 = sphi 0, %s117
      %s118 = sphi 0, %s115
      %s119 = sphi 0, %s118
      %s135 = sphi 0, %s119
      %s141 = sphi 0, %s143
      %s144 = sphi 0, %s141
      %s145 = sphi 0, %s144
      %s161 = sphi 0, %s145
      %s169 = sphi 0, %s171
      %s172 = sphi 0, %s169
      %s173 = sphi 0, %s172
      %s189 = sphi 0, %s173
    $region4: #{tpu_custom_call.1} parent=1 // loop_header_branch
      %24 = sbr.rel (%p22) target = $region8
    $region5: #{tpu_custom_call.1} parent=1 // loop_body
      %s26 = ssub.s32 %s21, 1
      %s27 = ssub.s32 %s21, 2
      %s34 = sadd.s32 1, %s29
      %p35 = scmp.ge.s32.totalorder %s34, 2
      %s36 = scalar_select %p35, 0, %s34
      %s37 = sadd.s32 1, %s28
      %s38 = scalar_select %p35, %s37, %s28
      %p39 = scmp.ge.s32.totalorder %s38, 1
      %s40 = scalar_select %p39, 0, %s38
      %s41 = ssub.s32 %s29, %s36
      %s42 = ssub.s32 %s28, %s40
      %s43 = sor.u32 %s41, %s42
      %p44 = scmp.eq.s32.totalorder %s43, 0
      %s46 = sadd.s32 %s45, 1
      %s47 = scalar_select %p44, %s45, %s46
      %p50 = pneg %p44
      %p51 = scmp.eq.s32.totalorder %s21, 1
      %p52 = por %p50, %p51
      %p53 = scmp.ne.s32.totalorder %s45, %s48
      %p54 = scmp.eq.s32.totalorder %s21, 0
      %p55 = por %p53, %p54
      %p56 = scmp.ne.s32.totalorder %s45, %s48
      %p57 = scmp.eq.s32.totalorder %s26, 1
      %p58 = por %p56, %p57
      %p59 = scmp.ne.s32.totalorder %s48, %s49
      %p60 = scmp.eq.s32.totalorder %s26, 0
      %p61 = por %p59, %p60
      %p62 = scmp.ne.s32.totalorder %s48, %s49
      %p63 = scmp.eq.s32.totalorder %s27, 1
      %p64 = por %p62, %p63
      %p66 = scmp.ne.s32.totalorder %s49, %s65
      %p67 = scmp.eq.s32.totalorder %s27, 0
      %p68 = por %p66, %p67
      %s70 = sadd.s32 %s69, 1
      %p73 = scmp.eq.s32.totalorder %s21, 1
      %p74 = scmp.ne.s32.totalorder %s69, %s71
      %p75 = scmp.eq.s32.totalorder %s21, 0
      %p76 = por %p74, %p75
      %p77 = scmp.ne.s32.totalorder %s69, %s71
      %p78 = scmp.eq.s32.totalorder %s26, 1
      %p79 = por %p77, %p78
      %p80 = scmp.ne.s32.totalorder %s71, %s72
      %p81 = scmp.eq.s32.totalorder %s26, 0
      %p82 = por %p80, %p81
      %p83 = scmp.ne.s32.totalorder %s71, %s72
      %p84 = scmp.eq.s32.totalorder %s27, 1
      %p85 = por %p83, %p84
      %p87 = scmp.ne.s32.totalorder %s72, %s86
      %p88 = scmp.eq.s32.totalorder %s27, 0
      %p89 = por %p87, %p88
      %s91 = sadd.s32 %s90, 1
      %p94 = scmp.eq.s32.totalorder %s21, 1
      %p95 = scmp.ne.s32.totalorder %s90, %s92
      %p96 = scmp.eq.s32.totalorder %s21, 0
      %p97 = por %p95, %p96
      %p98 = scmp.ne.s32.totalorder %s90, %s92
      %p99 = scmp.eq.s32.totalorder %s26, 1
      %p100 = por %p98, %p99
      %p101 = scmp.ne.s32.totalorder %s92, %s93
      %p102 = scmp.eq.s32.totalorder %s26, 0
      %p103 = por %p101, %p102
      %p104 = scmp.ne.s32.totalorder %s92, %s93
      %p105 = scmp.eq.s32.totalorder %s27, 1
      %p106 = por %p104, %p105
      %p108 = scmp.ne.s32.totalorder %s93, %s107
      %p109 = scmp.eq.s32.totalorder %s27, 0
      %p110 = por %p108, %p109
      %s111 = ssub.s32 %s29, %s36
      %s112 = ssub.s32 %s28, %s40
      %s113 = sor.u32 %s111, %s112
      %p114 = scmp.eq.s32.totalorder %s113, 0
      %s116 = sadd.s32 %s115, 1
      %s117 = scalar_select %p114, %s115, %s116
      %p120 = pneg %p114
      %p121 = scmp.eq.s32.totalorder %s21, 1
      %p122 = por %p120, %p121
      %p123 = scmp.ne.s32.totalorder %s115, %s118
      %p124 = scmp.eq.s32.totalorder %s21, 0
      %p125 = por %p123, %p124
      %p126 = scmp.ne.s32.totalorder %s115, %s118
      %p127 = scmp.eq.s32.totalorder %s26, 1
      %p128 = por %p126, %p127
      %p129 = scmp.ne.s32.totalorder %s118, %s119
      %p130 = scmp.eq.s32.totalorder %s26, 0
      %p131 = por %p129, %p130
      %p132 = scmp.ne.s32.totalorder %s118, %s119
      %p133 = scmp.eq.s32.totalorder %s27, 1
      %p134 = por %p132, %p133
      %p136 = scmp.ne.s32.totalorder %s119, %s135
      %p137 = scmp.eq.s32.totalorder %s27, 0
      %p138 = por %p136, %p137
      %s139 = ssub.s32 %s28, %s40
      %p140 = scmp.eq.s32.totalorder %s139, 0
      %s142 = sadd.s32 %s141, 1
      %s143 = scalar_select %p140, %s141, %s142
      %p146 = pneg %p140
      %p147 = scmp.eq.s32.totalorder %s21, 1
      %p148 = por %p146, %p147
      %p149 = scmp.ne.s32.totalorder %s141, %s144
      %p150 = scmp.eq.s32.totalorder %s21, 0
      %p151 = por %p149, %p150
      %p152 = scmp.ne.s32.totalorder %s141, %s144
      %p153 = scmp.eq.s32.totalorder %s26, 1
      %p154 = por %p152, %p153
      %p155 = scmp.ne.s32.totalorder %s144, %s145
      %p156 = scmp.eq.s32.totalorder %s26, 0
      %p157 = por %p155, %p156
      %p158 = scmp.ne.s32.totalorder %s144, %s145
      %p159 = scmp.eq.s32.totalorder %s27, 1
      %p160 = por %p158, %p159
      %p162 = scmp.ne.s32.totalorder %s145, %s161
      %p163 = scmp.eq.s32.totalorder %s27, 0
      %p164 = por %p162, %p163
      %s165 = ssub.s32 %s29, %s36
      %s166 = ssub.s32 %s28, %s40
      %s167 = sor.u32 %s165, %s166
      %p168 = scmp.eq.s32.totalorder %s167, 0
      %s170 = sadd.s32 %s169, 1
      %s171 = scalar_select %p168, %s169, %s170
      %p174 = pneg %p168
      %p175 = scmp.eq.s32.totalorder %s21, 1
      %p176 = por %p174, %p175
      %p177 = scmp.ne.s32.totalorder %s169, %s172
      %p178 = scmp.eq.s32.totalorder %s21, 0
      %p179 = por %p177, %p178
      %p180 = scmp.ne.s32.totalorder %s169, %s172
      %p181 = scmp.eq.s32.totalorder %s26, 1
      %p182 = por %p180, %p181
      %p183 = scmp.ne.s32.totalorder %s172, %s173
      %p184 = scmp.eq.s32.totalorder %s26, 0
      %p185 = por %p183, %p184
      %p186 = scmp.ne.s32.totalorder %s172, %s173
      %p187 = scmp.eq.s32.totalorder %s27, 1
      %p188 = por %p186, %p187
      %p190 = scmp.ne.s32.totalorder %s173, %s189
      %p191 = scmp.eq.s32.totalorder %s27, 0
      %p192 = por %p190, %p191
      %p193 = scmp.le.s32.totalorder 1, %s21
      %p194 = scmp.lt.s32.totalorder %s21, 3
      %p195 = pnand %p193, %p194
      %p196 = pneg %p195
      // Predicated region
      $region9: #{tpu_custom_call.1} parent=5 // pred_check
        _
      $region10: #{tpu_custom_call.1} parent=5 // pred_check_branch
        %198 = sbr.rel (%p195) target = $region12
      $region11: #{tpu_custom_call.1} parent=5 // pred_region
        %s199 = ssub.s32 %s21, 1
        // Predicated region
        $region13: #{tpu_custom_call.1} parent=11 // pred_check
          %p200 = pneg %p82
        $region14: #{tpu_custom_call.1} parent=11 // pred_check_branch
          %202 = sbr.rel (%p200) target = $region16
        $region15: #{tpu_custom_call.1} parent=11 // pred_region
          _
        $region16: #{tpu_custom_call.1} parent=11 // pred_fallthru
          _
        // Predicated region
        $region17: #{tpu_custom_call.1} parent=11 // pred_check
          %p203 = pneg %p103
        $region18: #{tpu_custom_call.1} parent=11 // pred_check_branch
          %205 = sbr.rel (%p203) target = $region20
        $region19: #{tpu_custom_call.1} parent=11 // pred_region
          _
        $region20: #{tpu_custom_call.1} parent=11 // pred_fallthru
          _
        // Predicated region
        $region21: #{tpu_custom_call.1} parent=11 // pred_check
          %p206 = pneg %p157
        $region22: #{tpu_custom_call.1} parent=11 // pred_check_branch
          %208 = sbr.rel (%p206) target = $region24
        $region23: #{tpu_custom_call.1} parent=11 // pred_region
          %s209 = smul.u32 2, %s30
          %p210 = scmp.lt.s32.totalorder %s209, 1
          %s211 = scalar_select %p210, %s209, 1
          %s212 = smul.addr %s211, 4
          %s213 = scalar_lea.vmem %s5, %s212
          %s214 = smul.u32 2, %s30
        $region24: #{tpu_custom_call.1} parent=11 // pred_fallthru
          _
      $region12: #{tpu_custom_call.1} parent=5 // pred_fallthru
        _
      %p215 = scmp.lt.s32.totalorder %s21, 2
      // Predicated region
      $region25: #{tpu_custom_call.1} parent=5 // pred_check
        %p216 = pneg %p215
      $region26: #{tpu_custom_call.1} parent=5 // pred_check_branch
        %218 = sbr.rel (%p216) target = $region28
      $region27: #{tpu_custom_call.1} parent=5 // pred_region
        // Predicated region
        $region29: #{tpu_custom_call.1} parent=27 // pred_check
          %p219 = pneg %p55
        $region30: #{tpu_custom_call.1} parent=27 // pred_check_branch
          %221 = sbr.rel (%p219) target = $region32
        $region31: #{tpu_custom_call.1} parent=27 // pred_region
          %s222 = smul.u32 2, %s28
          %p223 = scmp.lt.s32.totalorder %s29, 1
          %s224 = scalar_select %p223, %s29, 1
          %p225 = scmp.lt.s32.totalorder %s222, 1
          %s226 = scalar_select %p225, %s222, 1
          %s227 = smul.addr %s224, 2
          %s228 = sadd.s32 %s226, %s227
          %s229 = smul.addr %s228, 4
          %s230 = scalar_lea.vmem %s1, %s229
          %s231 = smul.u32 2, %s28
        $region32: #{tpu_custom_call.1} parent=27 // pred_fallthru
          _
        // Predicated region
        $region33: #{tpu_custom_call.1} parent=27 // pred_check
          %p232 = pneg %p125
        $region34: #{tpu_custom_call.1} parent=27 // pred_check_branch
          %234 = sbr.rel (%p232) target = $region36
        $region35: #{tpu_custom_call.1} parent=27 // pred_region
          %s235 = smul.u32 2, %s28
          %p236 = scmp.lt.s32.totalorder %s29, 1
          %s237 = scalar_select %p236, %s29, 1
          %p238 = scmp.lt.s32.totalorder %s235, 1
          %s239 = scalar_select %p238, %s235, 1
          %s240 = smul.addr %s237, 2
          %s241 = sadd.s32 %s239, %s240
          %s242 = smul.addr %s241, 8
          %s243 = scalar_lea.vmem %s4, %s242
          %s244 = smul.u32 2, %s28
        $region36: #{tpu_custom_call.1} parent=27 // pred_fallthru
          _
      $region28: #{tpu_custom_call.1} parent=5 // pred_fallthru
        _
      %p245 = scmp.le.s32.totalorder 1, %s21
      %p246 = scmp.lt.s32.totalorder %s21, 3
      %p247 = pnand %p245, %p246
      %p248 = pneg %p247
      // Predicated region
      $region37: #{tpu_custom_call.1} parent=5 // pred_check
        _
      $region38: #{tpu_custom_call.1} parent=5 // pred_check_branch
        %250 = sbr.rel (%p247) target = $region40
      $region39: #{tpu_custom_call.1} parent=5 // pred_region
        %s251 = ssub.s32 %s21, 1
        %s252 = smul.u32 2, %s30
        %p253 = scmp.lt.s32.totalorder %s31, 1
        %s254 = scalar_select %p253, %s31, 1
        %p255 = scmp.lt.s32.totalorder %s252, 1
        %s256 = scalar_select %p255, %s252, 1
        %s257 = smul.addr %s254, 2
        %s258 = sadd.s32 %s256, %s257
        %s259 = smul.addr %s258, 4
        %s260 = scalar_lea.vmem %s1, %s259
        %p261 = pneg %p61
        %p262 = pneg %p58
        %p263 = pneg %p82
        %p264 = pneg %p79
        %p265 = pneg %p103
        %p266 = pneg %p100
        %s267 = smul.u32 2, %s30
        %p268 = scmp.lt.s32.totalorder %s31, 1
        %s269 = scalar_select %p268, %s31, 1
        %p270 = scmp.lt.s32.totalorder %s267, 1
        %s271 = scalar_select %p270, %s267, 1
        %s272 = smul.addr %s269, 2
        %s273 = sadd.s32 %s271, %s272
        %s274 = smul.addr %s273, 8
        %s275 = scalar_lea.vmem %s4, %s274
        %p276 = pneg %p131
        %p277 = pneg %p128
        %s278 = smul.u32 2, %s30
        %p279 = scmp.lt.s32.totalorder %s278, 1
        %s280 = scalar_select %p279, %s278, 1
        %s281 = smul.addr %s280, 4
        %s282 = scalar_lea.vmem %s5, %s281
        %p283 = pneg %p157
        %p284 = pneg %p154
        %p285 = pneg %p185
        %p286 = pneg %p182
        %s287 = sand.u32 %s172, 1
        %s288 = scalar_lea.sflag [#allocation5], %s287
        %s289 = sand.u32 %s172, 1
        %s290 = smul.addr %s289, 16
        %s291 = scalar_lea.vmem [#allocation4], %s290
        %s292 = smul.u32 2, %s30
        %p293 = scmp.lt.s32.totalorder %s31, 1
        %s294 = scalar_select %p293, %s31, 1
        %p295 = scmp.lt.s32.totalorder %s292, 1
        %s296 = scalar_select %p295, %s292, 1
        %s297 = smul.addr %s294, 2
        %s298 = sadd.s32 %s296, %s297
        %s299 = smul.addr %s298, 4
        %s300 = scalar_lea.vmem %s1, %s299
        %s301 = smul.u32 2, %s30
        %s302 = smul.u32 2, %s30
        %p303 = scmp.lt.s32.totalorder %s31, 1
        %s304 = scalar_select %p303, %s31, 1
        %p305 = scmp.lt.s32.totalorder %s302, 1
        %s306 = scalar_select %p305, %s302, 1
        %s307 = smul.addr %s304, 2
        %s308 = sadd.s32 %s306, %s307
        %s309 = smul.addr %s308, 8
        %s310 = scalar_lea.vmem %s4, %s309
        %s311 = smul.u32 2, %s30
        %s312 = smul.u32 2, %s30
        %p313 = scmp.lt.s32.totalorder %s312, 1
        %s314 = scalar_select %p313, %s312, 1
        %s315 = smul.addr %s314, 4
        %s316 = scalar_lea.vmem %s5, %s315
        %s317 = smul.u32 2, %s30
        %s318 = smul.u32 2, %s30
        %s320 = sld [smem:[#allocation3 + %s31]]
        %v321 = vld [vmem:[%s300] sm:$0xf]
        %v322 = vld [vmem:[%s300 + $0x4] sm:$0xf]
        %v323 = vld [vmem:[%s2] sm:$0xf]
        %v324 = vld [vmem:[%s2 + $0x4] sm:$0xf]
        %v325 = vld [vmem:[%s2 + $0x8] sm:$0xf]
        %v326 = vld [vmem:[%s2 + $0xc] sm:$0xf]
        %v327 = vld [vmem:[%s2 + $0x10] sm:$0xf]
        %v328 = vld [vmem:[%s2 + $0x14] sm:$0xf]
        %v329 = vld [vmem:[%s2 + $0x18] sm:$0xf]
        %v330 = vld [vmem:[%s2 + $0x1c] sm:$0xf]
        %v331 = vld [vmem:[%s3] sm:$0x1]
        %v332 = vlaneseq
        %v333 = vshrl.u32 %v332, 7
        %v334 = vsub.s32 0, %v333
        %v335 = vrot.slane %v331, %v334
        %v338 = vunpack.c.l.b16 %v321
        %v339 = vunpack.c.l.b16 %v322
        %v340 = vpack.c.b16 %v339, %v338
        %v349 = vunpack.c.l.b16 %v323
        %v350 = vunpack.c.l.b16 %v324
        %v351 = vunpack.c.l.b16 %v325
        %v352 = vunpack.c.l.b16 %v326
        %v353 = vunpack.c.l.b16 %v327
        %v354 = vunpack.c.l.b16 %v328
        %v355 = vunpack.c.l.b16 %v329
        %v356 = vunpack.c.l.b16 %v330
        %v357 = vpack.c.b16 %v350, %v349
        %v358 = vpack.c.b16 %v352, %v351
        %v359 = vpack.c.b16 %v354, %v353
        %v360 = vpack.c.b16 %v356, %v355
        %vm365 = vcmask 523264
        %v367 = vsel %vm365, %v340, 0
        %369 = vmatprep.subr.bf16.mxu0 0
        %370 = vmatpush1.bf16.msra.mxu0 0
        %371 = vmatprep.subr.bf16.mxu0 0
        %372 = vmatpush1.bf16.msra.mxu0 0
        %373 = vmatprep.subr.bf16.mxu0 0
        %374 = vmatpush1.bf16.msra.mxu0 0
        %375 = vmatprep.subr.bf16.mxu0 0
        %376 = vmatpush1.bf16.msra.mxu0 0
        %377 = vmatprep.subr.bf16.mxu0 0
        %378 = vmatpush1.bf16.msra.mxu0 %v360
        %379 = vmatprep.subr.bf16.mxu0 0
        %380 = vmatpush1.bf16.msra.mxu0 %v359
        %381 = vmatprep.subr.bf16.mxu0 0
        %382 = vmatpush1.bf16.msra.mxu0 %v358
        %383 = vmatprep.subr.bf16.mxu0 0
        %384 = vmatpush1.bf16.msra.mxu0 %v357
        %385 = vmatprep.subr.bf16.mxu0 0
        %386 = vmatpush2.bf16.msra.mxu0 0
        %387 = vmatprep.subr.bf16.mxu0 0
        %388 = vmatpush2.bf16.msra.mxu0 0
        %389 = vmatprep.subr.bf16.mxu0 0
        %390 = vmatpush2.bf16.msra.mxu0 0
        %391 = vmatprep.subr.bf16.mxu0 0
        %392 = vmatpush2.bf16.msra.mxu0 0
        %393 = vmatprep.subr.bf16.mxu0 0
        %394 = vmatpush2.bf16.msra.mxu0 0
        %395 = vmatprep.subr.bf16.mxu0 0
        %396 = vmatpush2.bf16.msra.mxu0 0
        %397 = vmatprep.subr.bf16.mxu0 0
        %398 = vmatpush2.bf16.msra.mxu0 0
        %399 = vmatprep.subr.bf16.mxu0 0
        %400 = vmatpush2.bf16.msra.mxu0 0
        %401 = vmatprep.mubr.bf16.mxu0 0
        %402 = vmatmul.mubr.bf16.gmra.mxu0 %v367
        %v403 = vpop.f32.mrf.mxu0
        %v404 = vadd.f32 %v335, %v403
        %v405 = vpop.f32.mrf.mxu0
        %v406 = vpop.f32.mrf.mxu0
        %v407 = vadd.f32 %v335, %v406
        %v408 = vpop.f32.mrf.mxu0
        %409 = vdwg.mxu0
        %vm410 = vcmask 261120
        %v411 = vsel %vm410, %v404, 0.0
        %412 = vadd.xlane.f32.xlu0 %v411
        %v413 = vpop.xlane.xlu0 %412
        %v414 = vsel %vm410, %v407, 0.0
        %415 = vadd.xlane.f32.xlu0 %v414
        %v416 = vpop.xlane.xlu0 %415
        %v417 = vmul.f32 %v413, 0.03125
        %v418 = vmul.f32 %v416, 0.03125
        %v419 = vmul.f32 %v404, %v404
        %v420 = vmul.f32 %v407, %v407
        %v421 = vsel %vm410, %v419, 0.0
        %422 = vadd.xlane.f32.xlu0 %v421
        %v423 = vpop.xlane.xlu0 %422
        %v424 = vsel %vm410, %v420, 0.0
        %425 = vadd.xlane.f32.xlu0 %v424
        %v426 = vpop.xlane.xlu0 %425
        %v427 = vmul.f32 %v423, 0.03125
        %v428 = vmul.f32 %v426, 0.03125
        %v429 = vmul.f32 %v417, %v417
        %v430 = vmul.f32 %v418, %v418
        %v431 = vsub.f32 %v427, %v429
        %v432 = vsub.f32 %v428, %v430
        %v433 = vmax.f32 %v431, 0.0
        %v434 = vmax.f32 %v432, 0.0
        %v435 = vadd.f32 %v433, 1e-05
        %v436 = vadd.f32 %v434, 1e-05
        %v437 = vrsqrt.pop %v435
        %v438 = vrsqrt.pop %v436
        %v439 = vsub.f32 %v404, %v417
        %v440 = vsub.f32 %v407, %v418
        %v441 = vmul.f32 %v439, %v437
        %v442 = vmul.f32 %v440, %v438
        %v443 = vld [vmem:[%s3 + $0x1] sm:$0x1]
        %v444 = vstv %s320
        %v445 = vmul.f32 %v444, %v443
        %v446 = vld [vmem:[%s3 + $0x2] sm:$0x1]
        %v447 = vadd.f32 %v445, %v446
        %v448 = vld [vmem:[%s3 + $0x3] sm:$0x1]
        %v449 = vmul.f32 %v444, %v448
        %v450 = vld [vmem:[%s3 + $0x4] sm:$0x1]
        %v451 = vadd.f32 %v449, %v450
        %v452 = vlaneseq
        %v453 = vshrl.u32 %v452, 7
        %v454 = vsub.s32 0, %v453
        %v455 = vrot.slane %v447, %v454
        %v456 = vmul.f32 %v455, %v441
        %v457 = vmul.f32 %v455, %v442
        %v458 = vlaneseq
        %v459 = vshrl.u32 %v458, 7
        %v460 = vsub.s32 0, %v459
        %v461 = vrot.slane %v451, %v460
        %v462 = vadd.f32 %v456, %v461
        %v463 = vadd.f32 %v457, %v461
        %v464 = vld [vmem:[%s310] sm:$0xff]
        %v465 = vld [vmem:[%s310 + $0x8] sm:$0xff]
        %vm466 = vcmp.gt.f32.partialorder %v464, 0.5
        %vm467 = vcmp.gt.f32.partialorder %v465, 0.5
        %v468 = vld [vmem:[%s3 + $0x5] sm:$0x1]
        %v469 = vsel %vm466, 1, 0
        %v470 = vsel %vm467, 1, 0
        %471 = vset.pattern.permute.xlu0 0
        %472 = vperm.xlu0 %471, %v469
        %v473 = vpop.permute.xlu0 %472
        %474 = vset.pattern.permute.xlu0 0
        %475 = vperm.xlu0 %474, %v470
        %v476 = vpop.permute.xlu0 %475
        %vm477 = vcmp.eq.s32.totalorder %v473, 1
        %vm478 = vcmp.eq.s32.totalorder %v476, 1
        %v479 = vlaneseq
        %v480 = vshrl.u32 %v479, 7
        %v481 = vsub.s32 0, %v480
        %v482 = vrot.slane %v468, %v481
        %v483 = vsel %vm477, %v482, %v462
        %v484 = vsel %vm478, %v482, %v463
        %v485 = vld [vmem:[%s316] sm:$0xf]
        %v486 = vld [vmem:[%s316 + $0x4] sm:$0xf]
        %v487 = vunpack.c.l.bf16 %v485
        %v488 = vunpack.c.l.bf16 %v486
        %v489 = vadd.f32 %v483, %v487
        %v490 = vadd.f32 %v484, %v488
        %491 = vst.msk [vmem:[%s291] sm:$0xff] %vm410, %v489
        %492 = vst.msk [vmem:[%s291 + $0x8] sm:$0xff] %vm410, %v490
        %s493 = sand.u32 %s172, 1
        %s494 = scalar_lea.sflag [#allocation5], %s493
        %s495 = sand.u32 %s172, 1
        %s496 = smul.addr %s495, 16
        %s497 = scalar_lea.vmem [#allocation4], %s496
        // Predicated region
        $region41: #{tpu_custom_call.1} parent=39 // pred_check
          %p498 = pneg %p182
        $region42: #{tpu_custom_call.1} parent=39 // pred_check_branch
          %500 = sbr.rel (%p498) target = $region44
        $region43: #{tpu_custom_call.1} parent=39 // pred_region
          %s501 = smul.u32 2, %s30
          %s503 = ssub.s32 256, 256
          %504 = vsyncadd %s494, %s503
          %s505 = smul.addr %s31, 2
          %s506 = sadd.s32 %s501, %s505
          %s507 = smul.addr %s506, 128
          %s508 = scalar_lea.hbm %s6, %s507
          %s509 = sshll.u32 %s497, 4
          %s510 = int_to_ptr.vmem [resolvable:$true] %s509
          %515 = dma.vmem_to_hbm [thread:$0]  %s510, 256, %s508, %s494, 128, 128, 8
        $region44: #{tpu_custom_call.1} parent=39 // pred_fallthru
          _
      $region40: #{tpu_custom_call.1} parent=5 // pred_fallthru
        _
      %p516 = scmp.le.s32.totalorder 2, %s21
      // Predicated region
      $region45: #{tpu_custom_call.1} parent=5 // pred_check
        %p517 = pneg %p516
      $region46: #{tpu_custom_call.1} parent=5 // pred_check_branch
        %519 = sbr.rel (%p517) target = $region48
      $region47: #{tpu_custom_call.1} parent=5 // pred_region
        %s520 = ssub.s32 %s21, 2
        // Predicated region
        $region49: #{tpu_custom_call.1} parent=47 // pred_check
          %p521 = pneg %p188
        $region50: #{tpu_custom_call.1} parent=47 // pred_check_branch
          %523 = sbr.rel (%p521) target = $region52
        $region51: #{tpu_custom_call.1} parent=47 // pred_region
          %s524 = sand.u32 %s173, 1
          %s525 = scalar_lea.sflag [#allocation5], %s524
          %s526 = sand.u32 %s173, 1
          %s527 = smul.addr %s526, 16
          %s528 = scalar_lea.vmem [#allocation4], %s527
          %529 = dma.done %s525, 256
        $region52: #{tpu_custom_call.1} parent=47 // pred_fallthru
          _
      $region48: #{tpu_custom_call.1} parent=5 // pred_fallthru
        _
    $region6: #{tpu_custom_call.1} parent=1 // loop_footer
      %s25 = sadd.s32 1, %s21
    $region7: #{tpu_custom_call.1} parent=1 // loop_footer_branch
      %20 = sbr.rel target = $region3
    $region8: #{tpu_custom_call.1} parent=1 // loop_exit
      _
    %530 = vsyncpa [#allocation5], 1
    %s531 = scalar_lea.sflag [#allocation5], 1
    %532 = vsyncpa %s531, 1

</llo_original>
